<compile_context>
chip_gen: v7x
topology: tpu7x:2x2x1
jax: 0.10.0
libtpu: 0.0.40
codegen_flags: <defaults>
</compile_context>

<pallas_src>
import functools

import jax
import jax.numpy as jnp
from jax.experimental import pallas as pl
from jax.experimental.pallas import tpu as pltpu

PAD = 128          # lane-padded width for every layer
NUM_LAYERS = 11    # 10 hidden linears (with bias) + 1 output linear (no bias)
MXU_DTYPE = jnp.bfloat16


def _round_up(x, m):
    return ((x + m - 1) // m) * m


# --------------------------------------------------------------------------
# Kernel
# --------------------------------------------------------------------------
def mlp_kernel(x_ref, w_ref, b_ref, o_ref):
    """x_ref: (TILE_B, 128) f32; w_ref: (11, 128, 128) bf16;
    b_ref: (10, 1, 128) f32; o_ref: (TILE_B, 128) f32."""
    mxu = w_ref.dtype

    def lin(h, i):
        # MXU matmul in bf16 with f32 accumulation; bias add in f32 (VPU).
        y = jnp.dot(h.astype(mxu), w_ref[i], preferred_element_type=jnp.float32)
        return y + b_ref[i]

    h = x_ref[...]                       # f32 activations
    h = jax.nn.relu(lin(h, 0))           # layer1
    h = jax.nn.relu(lin(h, 1))           # layer2
    h = jax.nn.relu(lin(h, 2))           # layer3
    # TODO(synk): nn.Dropout(p=0.1) is identity here (eval/inference
    # semantics); training-mode masking would use pltpu.prng_seed +
    # pltpu.prng_random_bits.
    h = jax.nn.relu(lin(h, 3))           # layer4
    h = jax.nn.relu(lin(h, 4))           # layer5
    h = jax.nn.relu(lin(h, 5))           # layer6
    h = jax.nn.sigmoid(lin(h, 6))        # layer7
    h = jax.nn.sigmoid(lin(h, 7))        # layer8
    h = jax.nn.sigmoid(lin(h, 8))        # layer9
    h = jnp.tanh(lin(h, 9))              # layer10
    # output layer: bias=False
    o_ref[...] = jnp.dot(h.astype(mxu), w_ref[10],
                         preferred_element_type=jnp.float32)


# --------------------------------------------------------------------------
# Parameter packing (do once, outside the hot path)
# --------------------------------------------------------------------------
def pack_params(params, mxu_dtype=MXU_DTYPE):
    """params: flat list [w1,b1,...,w10,b10,wout] with weights as [in, out].

    Returns (w_slab [11,128,128] mxu_dtype, b_slab [10,1,128] f32), both
    zero-padded in every feature dimension.
    """
    weights = list(params[0:20:2]) + [params[20]]
    biases = list(params[1:20:2])

    w_slab = jnp.zeros((NUM_LAYERS, PAD, PAD), dtype=mxu_dtype)
    for i, w in enumerate(weights):
        w_slab = w_slab.at[i, :w.shape[0], :w.shape[1]].set(w.astype(mxu_dtype))

    b_slab = jnp.zeros((NUM_LAYERS - 1, 1, PAD), dtype=jnp.float32)
    for i, b in enumerate(biases):
        b_slab = b_slab.at[i, :, :b.shape[1]].set(b.astype(jnp.float32))
    return w_slab, b_slab


# --------------------------------------------------------------------------
# Wrapper
# --------------------------------------------------------------------------
@functools.partial(jax.jit, static_argnames=("num_actions", "tile_b"))
def mlp_forward(x, w_slab, b_slab, num_actions, tile_b=None):
    """x: [batch, feature_vector_size] (any float dtype).
    Returns [batch, num_actions] f32."""
    batch, fin = x.shape

    if tile_b is None:
        # Big batches: 256-row tiles; small batches: one tile padded to a
        # multiple of 8 rows (f32 sublane group).
        tile_b = 256 if batch >= 256 else _round_up(max(batch, 1), 8)
    batch_p = _round_up(batch, tile_b)

    # Zero-pad batch rows and feature lanes to (batch_p, 128).
    x_p = jnp.zeros((batch_p, PAD), jnp.float32)
    x_p = x_p.at[:batch, :fin].set(x.astype(jnp.float32))

    grid = (batch_p // tile_b,)

    flops = 2 * batch_p * PAD * PAD * NUM_LAYERS
    transcendentals = 4 * batch_p * PAD            # 3 sigmoid + 1 tanh layers
    bytes_accessed = (x_p.size * 4 + batch_p * PAD * 4
                      + w_slab.size * 2 + b_slab.size * 4)

    out = pl.pallas_call(
        mlp_kernel,
        out_shape=jax.ShapeDtypeStruct((batch_p, PAD), jnp.float32),
        grid_spec=pltpu.PrefetchScalarGridSpec(
            num_scalar_prefetch=0,
            grid=grid,
            in_specs=[
                # activations: tiled over the batch grid
                pl.BlockSpec((tile_b, PAD), lambda i: (i, 0)),
                # weight slab: constant index map -> resident in VMEM
                pl.BlockSpec((NUM_LAYERS, PAD, PAD), lambda i: (0, 0, 0)),
                # bias slab: constant index map -> resident in VMEM
                pl.BlockSpec((NUM_LAYERS - 1, 1, PAD), lambda i: (0, 0, 0)),
            ],
            out_specs=pl.BlockSpec((tile_b, PAD), lambda i: (i, 0)),
        ),
        compiler_params=pltpu.CompilerParams(
            dimension_semantics=("parallel",)),
        cost_estimate=pl.CostEstimate(flops=flops,
                                      transcendentals=transcendentals,
                                      bytes_accessed=bytes_accessed),
    )(x_p, w_slab, b_slab)

    return out[:batch, :num_actions]


# --------------------------------------------------------------------------
# Init + pure-JAX reference
# --------------------------------------------------------------------------
def init_params(key, feature_vector_size, nodes_per_layer, num_actions):
    """Weights: xavier_uniform; biases: PyTorch Linear default uniform.
    Weights stored transposed as [in, out]; biases as [1, out]."""
    sizes = [feature_vector_size]
    n = nodes_per_layer
    for _ in range(10):
        sizes.append(n)
        n -= 2
    out_in = sizes[-1]

    params = []
    keys = jax.random.split(key, 2 * 10 + 1)
    for i in range(10):
        fan_in, fan_out = sizes[i], sizes[i + 1]
        limit = (6.0 / (fan_in + fan_out)) ** 0.5
        w = jax.random.uniform(keys[2 * i], (fan_in, fan_out),
                               minval=-limit, maxval=limit, dtype=jnp.float32)
        bb = 1.0 / (fan_in ** 0.5)
        b = jax.random.uniform(keys[2 * i + 1], (1, fan_out),
                               minval=-bb, maxval=bb, dtype=jnp.float32)
        params += [w, b]
    limit = (6.0 / (out_in + num_actions)) ** 0.5
    wout = jax.random.uniform(keys[-1], (out_in, num_actions),
                              minval=-limit, maxval=limit, dtype=jnp.float32)
    params.append(wout)
    return params


def reference_forward(x, params, mxu_dtype=None):
    """Pure-JAX reference.  If mxu_dtype is given, matmul operands are cast to
    it (matching the kernel's bf16-MXU path) with f32 accumulation."""
    (w1, b1, w2, b2, w3, b3, w4, b4, w5, b5,
     w6, b6, w7, b7, w8, b8, w9, b9, w10, b10, wout) = params

    def mm(h, w):
        if mxu_dtype is None:
            return jnp.dot(h, w, preferred_element_type=jnp.float32)
        return jnp.dot(h.astype(mxu_dtype), w.astype(mxu_dtype),
                       preferred_element_type=jnp.float32)

    h = x.astype(jnp.float32)
    h = jax.nn.relu(mm(h, w1) + b1)
    h = jax.nn.relu(mm(h, w2) + b2)
    h = jax.nn.relu(mm(h, w3) + b3)
    h = jax.nn.relu(mm(h, w4) + b4)
    h = jax.nn.relu(mm(h, w5) + b5)
    h = jax.nn.relu(mm(h, w6) + b6)
    h = jax.nn.sigmoid(mm(h, w7) + b7)
    h = jax.nn.sigmoid(mm(h, w8) + b8)
    h = jax.nn.sigmoid(mm(h, w9) + b9)
    h = jnp.tanh(mm(h, w10) + b10)
    return mm(h, wout)


# --------------------------------------------------------------------------
# Demo / self-check
# --------------------------------------------------------------------------
if __name__ == "__main__":
    # config: feature_vector_size=32, nodes_per_layer=48, num_actions=8
    feature_vector_size = 32
    nodes_per_layer = 48
    num_actions = 8

    key = jax.random.PRNGKey(0)
    k_x, k_p, k_x2 = jax.random.split(key, 3)
    params = init_params(k_p, feature_vector_size, nodes_per_layer, num_actions)
    w_slab, b_slab = pack_params(params)

    # --- small-batch case (batch=2, padded to one 8-row tile) ---
    x = jax.random.normal(k_x, (2, feature_vector_size), dtype=jnp.float32)
    out = jax.block_until_ready(mlp_forward(x, w_slab, b_slab, num_actions))
    assert out.shape == (2, num_actions)

    ref_matched = reference_forward(x, params, mxu_dtype=MXU_DTYPE)
    ref_f32 = reference_forward(x, params)
    assert jnp.allclose(out, ref_matched, atol=2e-4, rtol=1e-3), (
        "mismatch vs bf16-operand reference")
    assert jnp.allclose(out, ref_f32, atol=0.5), (
        "mismatch vs f32 reference (sanity bound)")

    # --- batched case (exercises the batch grid: 512 rows -> 2 tiles of 256) ---
    x2 = jax.random.normal(k_x2, (512, feature_vector_size), dtype=jnp.float32)
    out2 = jax.block_until_ready(mlp_forward(x2, w_slab, b_slab, num_actions))
    assert out2.shape == (512, num_actions)
    ref2 = reference_forward(x2, params, mxu_dtype=MXU_DTYPE)
    assert jnp.allclose(out2, ref2, atol=2e-4, rtol=1e-3), (
        "batched mismatch vs bf16-operand reference")

    print("KERNEL_OK")
</pallas_src>

<mosaic_0001>
module attributes {stable_mosaic.version = 11 : i64} {
  func.func @mlp_kernel(%arg0: i32, %arg1: memref<8x128xf32, #tpu.memory_space<vmem>>, %arg2: memref<11x128x128xbf16, #tpu.memory_space<vmem>>, %arg3: memref<10x1x128xf32, #tpu.memory_space<vmem>>, %arg4: memref<8x128xf32, #tpu.memory_space<vmem>>) attributes {dimension_semantics = [#tpu.dimension_semantics<parallel>], iteration_bounds = array<i64: 1>, scalar_prefetch = 0 : i64, scratch_operands = 0 : i64, tpu.core_type = #tpu.core_type<tc>, window_params = [{transform_indices = @transform_0, window_bounds = array<i64: 8, 128>}, {pipeline_mode = #tpu.pipeline_mode<synchronous>, transform_indices = @transform_1, window_bounds = array<i64: 11, 128, 128>}, {pipeline_mode = #tpu.pipeline_mode<synchronous>, transform_indices = @transform_2, window_bounds = array<i64: 10, 1, 128>}, {transform_indices = @transform_3, window_bounds = array<i64: 8, 128>}]} {
    %c0 = arith.constant 0 : index
    %c0_0 = arith.constant 0 : index
    %0 = vector.load %arg1[%c0, %c0_0] : memref<8x128xf32, #tpu.memory_space<vmem>>, vector<8x128xf32>
    %1 = arith.truncf %0 : vector<8x128xf32> to vector<8x128xbf16>
    %c0_1 = arith.constant 0 : index
    %c0_2 = arith.constant 0 : index
    %c0_3 = arith.constant 0 : index
    %2 = vector.load %arg2[%c0_1, %c0_2, %c0_3] : memref<11x128x128xbf16, #tpu.memory_space<vmem>>, vector<1x128x128xbf16>
    %3 = vector.shape_cast %2 : vector<1x128x128xbf16> to vector<128x128xbf16>
    %cst = arith.constant dense<0.000000e+00> : vector<8x128xf32>
    %4 = tpu.matmul %1, %3, %cst {dimension_numbers = #tpu.dot_dimension_numbers<[1], [0], [0], [1], [0, 0, 1, 1], [], []>} : vector<8x128xbf16>, vector<128x128xbf16>, vector<8x128xf32> -> vector<8x128xf32>
    %c0_4 = arith.constant 0 : index
    %c0_5 = arith.constant 0 : index
    %c0_6 = arith.constant 0 : index
    %5 = vector.load %arg3[%c0_4, %c0_5, %c0_6] : memref<10x1x128xf32, #tpu.memory_space<vmem>>, vector<1x1x128xf32>
    %6 = vector.shape_cast %5 : vector<1x1x128xf32> to vector<1x128xf32>
    %7 = vector.broadcast %6 : vector<1x128xf32> to vector<8x128xf32>
    %8 = arith.addf %4, %7 : vector<8x128xf32>
    %cst_7 = arith.constant 0.000000e+00 : f32
    %9 = vector.broadcast %cst_7 : f32 to vector<8x128xf32>
    %10 = arith.maximumf %8, %9 : vector<8x128xf32>
    %11 = arith.truncf %10 : vector<8x128xf32> to vector<8x128xbf16>
    %c1 = arith.constant 1 : index
    %c0_8 = arith.constant 0 : index
    %c0_9 = arith.constant 0 : index
    %12 = vector.load %arg2[%c1, %c0_8, %c0_9] : memref<11x128x128xbf16, #tpu.memory_space<vmem>>, vector<1x128x128xbf16>
    %13 = vector.shape_cast %12 : vector<1x128x128xbf16> to vector<128x128xbf16>
    %cst_10 = arith.constant dense<0.000000e+00> : vector<8x128xf32>
    %14 = tpu.matmul %11, %13, %cst_10 {dimension_numbers = #tpu.dot_dimension_numbers<[1], [0], [0], [1], [0, 0, 1, 1], [], []>} : vector<8x128xbf16>, vector<128x128xbf16>, vector<8x128xf32> -> vector<8x128xf32>
    %c1_11 = arith.constant 1 : index
    %c0_12 = arith.constant 0 : index
    %c0_13 = arith.constant 0 : index
    %15 = vector.load %arg3[%c1_11, %c0_12, %c0_13] : memref<10x1x128xf32, #tpu.memory_space<vmem>>, vector<1x1x128xf32>
    %16 = vector.shape_cast %15 : vector<1x1x128xf32> to vector<1x128xf32>
    %17 = vector.broadcast %16 : vector<1x128xf32> to vector<8x128xf32>
    %18 = arith.addf %14, %17 : vector<8x128xf32>
    %cst_14 = arith.constant 0.000000e+00 : f32
    %19 = vector.broadcast %cst_14 : f32 to vector<8x128xf32>
    %20 = arith.maximumf %18, %19 : vector<8x128xf32>
    %21 = arith.truncf %20 : vector<8x128xf32> to vector<8x128xbf16>
    %c2 = arith.constant 2 : index
    %c0_15 = arith.constant 0 : index
    %c0_16 = arith.constant 0 : index
    %22 = vector.load %arg2[%c2, %c0_15, %c0_16] : memref<11x128x128xbf16, #tpu.memory_space<vmem>>, vector<1x128x128xbf16>
    %23 = vector.shape_cast %22 : vector<1x128x128xbf16> to vector<128x128xbf16>
    %cst_17 = arith.constant dense<0.000000e+00> : vector<8x128xf32>
    %24 = tpu.matmul %21, %23, %cst_17 {dimension_numbers = #tpu.dot_dimension_numbers<[1], [0], [0], [1], [0, 0, 1, 1], [], []>} : vector<8x128xbf16>, vector<128x128xbf16>, vector<8x128xf32> -> vector<8x128xf32>
    %c2_18 = arith.constant 2 : index
    %c0_19 = arith.constant 0 : index
    %c0_20 = arith.constant 0 : index
    %25 = vector.load %arg3[%c2_18, %c0_19, %c0_20] : memref<10x1x128xf32, #tpu.memory_space<vmem>>, vector<1x1x128xf32>
    %26 = vector.shape_cast %25 : vector<1x1x128xf32> to vector<1x128xf32>
    %27 = vector.broadcast %26 : vector<1x128xf32> to vector<8x128xf32>
    %28 = arith.addf %24, %27 : vector<8x128xf32>
    %cst_21 = arith.constant 0.000000e+00 : f32
    %29 = vector.broadcast %cst_21 : f32 to vector<8x128xf32>
    %30 = arith.maximumf %28, %29 : vector<8x128xf32>
    %31 = arith.truncf %30 : vector<8x128xf32> to vector<8x128xbf16>
    %c3 = arith.constant 3 : index
    %c0_22 = arith.constant 0 : index
    %c0_23 = arith.constant 0 : index
    %32 = vector.load %arg2[%c3, %c0_22, %c0_23] : memref<11x128x128xbf16, #tpu.memory_space<vmem>>, vector<1x128x128xbf16>
    %33 = vector.shape_cast %32 : vector<1x128x128xbf16> to vector<128x128xbf16>
    %cst_24 = arith.constant dense<0.000000e+00> : vector<8x128xf32>
    %34 = tpu.matmul %31, %33, %cst_24 {dimension_numbers = #tpu.dot_dimension_numbers<[1], [0], [0], [1], [0, 0, 1, 1], [], []>} : vector<8x128xbf16>, vector<128x128xbf16>, vector<8x128xf32> -> vector<8x128xf32>
    %c3_25 = arith.constant 3 : index
    %c0_26 = arith.constant 0 : index
    %c0_27 = arith.constant 0 : index
    %35 = vector.load %arg3[%c3_25, %c0_26, %c0_27] : memref<10x1x128xf32, #tpu.memory_space<vmem>>, vector<1x1x128xf32>
    %36 = vector.shape_cast %35 : vector<1x1x128xf32> to vector<1x128xf32>
    %37 = vector.broadcast %36 : vector<1x128xf32> to vector<8x128xf32>
    %38 = arith.addf %34, %37 : vector<8x128xf32>
    %cst_28 = arith.constant 0.000000e+00 : f32
    %39 = vector.broadcast %cst_28 : f32 to vector<8x128xf32>
    %40 = arith.maximumf %38, %39 : vector<8x128xf32>
    %41 = arith.truncf %40 : vector<8x128xf32> to vector<8x128xbf16>
    %c4 = arith.constant 4 : index
    %c0_29 = arith.constant 0 : index
    %c0_30 = arith.constant 0 : index
    %42 = vector.load %arg2[%c4, %c0_29, %c0_30] : memref<11x128x128xbf16, #tpu.memory_space<vmem>>, vector<1x128x128xbf16>
    %43 = vector.shape_cast %42 : vector<1x128x128xbf16> to vector<128x128xbf16>
    %cst_31 = arith.constant dense<0.000000e+00> : vector<8x128xf32>
    %44 = tpu.matmul %41, %43, %cst_31 {dimension_numbers = #tpu.dot_dimension_numbers<[1], [0], [0], [1], [0, 0, 1, 1], [], []>} : vector<8x128xbf16>, vector<128x128xbf16>, vector<8x128xf32> -> vector<8x128xf32>
    %c4_32 = arith.constant 4 : index
    %c0_33 = arith.constant 0 : index
    %c0_34 = arith.constant 0 : index
    %45 = vector.load %arg3[%c4_32, %c0_33, %c0_34] : memref<10x1x128xf32, #tpu.memory_space<vmem>>, vector<1x1x128xf32>
    %46 = vector.shape_cast %45 : vector<1x1x128xf32> to vector<1x128xf32>
    %47 = vector.broadcast %46 : vector<1x128xf32> to vector<8x128xf32>
    %48 = arith.addf %44, %47 : vector<8x128xf32>
    %cst_35 = arith.constant 0.000000e+00 : f32
    %49 = vector.broadcast %cst_35 : f32 to vector<8x128xf32>
    %50 = arith.maximumf %48, %49 : vector<8x128xf32>
    %51 = arith.truncf %50 : vector<8x128xf32> to vector<8x128xbf16>
    %c5 = arith.constant 5 : index
    %c0_36 = arith.constant 0 : index
    %c0_37 = arith.constant 0 : index
    %52 = vector.load %arg2[%c5, %c0_36, %c0_37] : memref<11x128x128xbf16, #tpu.memory_space<vmem>>, vector<1x128x128xbf16>
    %53 = vector.shape_cast %52 : vector<1x128x128xbf16> to vector<128x128xbf16>
    %cst_38 = arith.constant dense<0.000000e+00> : vector<8x128xf32>
    %54 = tpu.matmul %51, %53, %cst_38 {dimension_numbers = #tpu.dot_dimension_numbers<[1], [0], [0], [1], [0, 0, 1, 1], [], []>} : vector<8x128xbf16>, vector<128x128xbf16>, vector<8x128xf32> -> vector<8x128xf32>
    %c5_39 = arith.constant 5 : index
    %c0_40 = arith.constant 0 : index
    %c0_41 = arith.constant 0 : index
    %55 = vector.load %arg3[%c5_39, %c0_40, %c0_41] : memref<10x1x128xf32, #tpu.memory_space<vmem>>, vector<1x1x128xf32>
    %56 = vector.shape_cast %55 : vector<1x1x128xf32> to vector<1x128xf32>
    %57 = vector.broadcast %56 : vector<1x128xf32> to vector<8x128xf32>
    %58 = arith.addf %54, %57 : vector<8x128xf32>
    %cst_42 = arith.constant 0.000000e+00 : f32
    %59 = vector.broadcast %cst_42 : f32 to vector<8x128xf32>
    %60 = arith.maximumf %58, %59 : vector<8x128xf32>
    %61 = arith.truncf %60 : vector<8x128xf32> to vector<8x128xbf16>
    %c6 = arith.constant 6 : index
    %c0_43 = arith.constant 0 : index
    %c0_44 = arith.constant 0 : index
    %62 = vector.load %arg2[%c6, %c0_43, %c0_44] : memref<11x128x128xbf16, #tpu.memory_space<vmem>>, vector<1x128x128xbf16>
    %63 = vector.shape_cast %62 : vector<1x128x128xbf16> to vector<128x128xbf16>
    %cst_45 = arith.constant dense<0.000000e+00> : vector<8x128xf32>
    %64 = tpu.matmul %61, %63, %cst_45 {dimension_numbers = #tpu.dot_dimension_numbers<[1], [0], [0], [1], [0, 0, 1, 1], [], []>} : vector<8x128xbf16>, vector<128x128xbf16>, vector<8x128xf32> -> vector<8x128xf32>
    %c6_46 = arith.constant 6 : index
    %c0_47 = arith.constant 0 : index
    %c0_48 = arith.constant 0 : index
    %65 = vector.load %arg3[%c6_46, %c0_47, %c0_48] : memref<10x1x128xf32, #tpu.memory_space<vmem>>, vector<1x1x128xf32>
    %66 = vector.shape_cast %65 : vector<1x1x128xf32> to vector<1x128xf32>
    %67 = vector.broadcast %66 : vector<1x128xf32> to vector<8x128xf32>
    %68 = arith.addf %64, %67 : vector<8x128xf32>
    %69 = arith.negf %68 : vector<8x128xf32>
    %70 = math.exp %69 : vector<8x128xf32>
    %cst_49 = arith.constant 1.000000e+00 : f32
    %71 = vector.broadcast %cst_49 : f32 to vector<8x128xf32>
    %72 = arith.addf %71, %70 : vector<8x128xf32>
    %73 = arith.divf %71, %72 : vector<8x128xf32>
    %74 = arith.truncf %73 : vector<8x128xf32> to vector<8x128xbf16>
    %c7 = arith.constant 7 : index
    %c0_50 = arith.constant 0 : index
    %c0_51 = arith.constant 0 : index
    %75 = vector.load %arg2[%c7, %c0_50, %c0_51] : memref<11x128x128xbf16, #tpu.memory_space<vmem>>, vector<1x128x128xbf16>
    %76 = vector.shape_cast %75 : vector<1x128x128xbf16> to vector<128x128xbf16>
    %cst_52 = arith.constant dense<0.000000e+00> : vector<8x128xf32>
    %77 = tpu.matmul %74, %76, %cst_52 {dimension_numbers = #tpu.dot_dimension_numbers<[1], [0], [0], [1], [0, 0, 1, 1], [], []>} : vector<8x128xbf16>, vector<128x128xbf16>, vector<8x128xf32> -> vector<8x128xf32>
    %c7_53 = arith.constant 7 : index
    %c0_54 = arith.constant 0 : index
    %c0_55 = arith.constant 0 : index
    %78 = vector.load %arg3[%c7_53, %c0_54, %c0_55] : memref<10x1x128xf32, #tpu.memory_space<vmem>>, vector<1x1x128xf32>
    %79 = vector.shape_cast %78 : vector<1x1x128xf32> to vector<1x128xf32>
    %80 = vector.broadcast %79 : vector<1x128xf32> to vector<8x128xf32>
    %81 = arith.addf %77, %80 : vector<8x128xf32>
    %82 = arith.negf %81 : vector<8x128xf32>
    %83 = math.exp %82 : vector<8x128xf32>
    %cst_56 = arith.constant 1.000000e+00 : f32
    %84 = vector.broadcast %cst_56 : f32 to vector<8x128xf32>
    %85 = arith.addf %84, %83 : vector<8x128xf32>
    %86 = arith.divf %84, %85 : vector<8x128xf32>
    %87 = arith.truncf %86 : vector<8x128xf32> to vector<8x128xbf16>
    %c8 = arith.constant 8 : index
    %c0_57 = arith.constant 0 : index
    %c0_58 = arith.constant 0 : index
    %88 = vector.load %arg2[%c8, %c0_57, %c0_58] : memref<11x128x128xbf16, #tpu.memory_space<vmem>>, vector<1x128x128xbf16>
    %89 = vector.shape_cast %88 : vector<1x128x128xbf16> to vector<128x128xbf16>
    %cst_59 = arith.constant dense<0.000000e+00> : vector<8x128xf32>
    %90 = tpu.matmul %87, %89, %cst_59 {dimension_numbers = #tpu.dot_dimension_numbers<[1], [0], [0], [1], [0, 0, 1, 1], [], []>} : vector<8x128xbf16>, vector<128x128xbf16>, vector<8x128xf32> -> vector<8x128xf32>
    %c8_60 = arith.constant 8 : index
    %c0_61 = arith.constant 0 : index
    %c0_62 = arith.constant 0 : index
    %91 = vector.load %arg3[%c8_60, %c0_61, %c0_62] : memref<10x1x128xf32, #tpu.memory_space<vmem>>, vector<1x1x128xf32>
    %92 = vector.shape_cast %91 : vector<1x1x128xf32> to vector<1x128xf32>
    %93 = vector.broadcast %92 : vector<1x128xf32> to vector<8x128xf32>
    %94 = arith.addf %90, %93 : vector<8x128xf32>
    %95 = arith.negf %94 : vector<8x128xf32>
    %96 = math.exp %95 : vector<8x128xf32>
    %cst_63 = arith.constant 1.000000e+00 : f32
    %97 = vector.broadcast %cst_63 : f32 to vector<8x128xf32>
    %98 = arith.addf %97, %96 : vector<8x128xf32>
    %99 = arith.divf %97, %98 : vector<8x128xf32>
    %100 = arith.truncf %99 : vector<8x128xf32> to vector<8x128xbf16>
    %c9 = arith.constant 9 : index
    %c0_64 = arith.constant 0 : index
    %c0_65 = arith.constant 0 : index
    %101 = vector.load %arg2[%c9, %c0_64, %c0_65] : memref<11x128x128xbf16, #tpu.memory_space<vmem>>, vector<1x128x128xbf16>
    %102 = vector.shape_cast %101 : vector<1x128x128xbf16> to vector<128x128xbf16>
    %cst_66 = arith.constant dense<0.000000e+00> : vector<8x128xf32>
    %103 = tpu.matmul %100, %102, %cst_66 {dimension_numbers = #tpu.dot_dimension_numbers<[1], [0], [0], [1], [0, 0, 1, 1], [], []>} : vector<8x128xbf16>, vector<128x128xbf16>, vector<8x128xf32> -> vector<8x128xf32>
    %c9_67 = arith.constant 9 : index
    %c0_68 = arith.constant 0 : index
    %c0_69 = arith.constant 0 : index
    %104 = vector.load %arg3[%c9_67, %c0_68, %c0_69] : memref<10x1x128xf32, #tpu.memory_space<vmem>>, vector<1x1x128xf32>
    %105 = vector.shape_cast %104 : vector<1x1x128xf32> to vector<1x128xf32>
    %106 = vector.broadcast %105 : vector<1x128xf32> to vector<8x128xf32>
    %107 = arith.addf %103, %106 : vector<8x128xf32>
    %108 = math.tanh %107 : vector<8x128xf32>
    %109 = arith.truncf %108 : vector<8x128xf32> to vector<8x128xbf16>
    %c10 = arith.constant 10 : index
    %c0_70 = arith.constant 0 : index
    %c0_71 = arith.constant 0 : index
    %110 = vector.load %arg2[%c10, %c0_70, %c0_71] : memref<11x128x128xbf16, #tpu.memory_space<vmem>>, vector<1x128x128xbf16>
    %111 = vector.shape_cast %110 : vector<1x128x128xbf16> to vector<128x128xbf16>
    %cst_72 = arith.constant dense<0.000000e+00> : vector<8x128xf32>
    %112 = tpu.matmul %109, %111, %cst_72 {dimension_numbers = #tpu.dot_dimension_numbers<[1], [0], [0], [1], [0, 0, 1, 1], [], []>} : vector<8x128xbf16>, vector<128x128xbf16>, vector<8x128xf32> -> vector<8x128xf32>
    %c0_73 = arith.constant 0 : index
    %c0_74 = arith.constant 0 : index
    %113 = vector.load %arg4[%c0_73, %c0_74] : memref<8x128xf32, #tpu.memory_space<vmem>>, vector<8x128xf32>
    tpu.vector_store %arg4[%c0_73, %c0_74], %112 {strides = array<i32>} : memref<8x128xf32, #tpu.memory_space<vmem>>, vector<8x128xf32>,
    return
  }
  func.func @transform_0(%arg0: i32) -> (i32, i32) {
    %c0_i32 = arith.constant 0 : i32
    %c0_i32_0 = arith.constant 0 : i32
    return %arg0, %c0_i32 : i32, i32
  }
  func.func @transform_1(%arg0: i32) -> (i32, i32, i32) {
    %c0_i32 = arith.constant 0 : i32
    %c0_i32_0 = arith.constant 0 : i32
    %c0_i32_1 = arith.constant 0 : i32
    %c0_i32_2 = arith.constant 0 : i32
    return %c0_i32, %c0_i32_0, %c0_i32_1 : i32, i32, i32
  }
  func.func @transform_2(%arg0: i32) -> (i32, i32, i32) {
    %c0_i32 = arith.constant 0 : i32
    %c0_i32_0 = arith.constant 0 : i32
    %c0_i32_1 = arith.constant 0 : i32
    %c0_i32_2 = arith.constant 0 : i32
    return %c0_i32, %c0_i32_0, %c0_i32_1 : i32, i32, i32
  }
  func.func @transform_3(%arg0: i32) -> (i32, i32) {
    %c0_i32 = arith.constant 0 : i32
    %c0_i32_0 = arith.constant 0 : i32
    return %arg0, %c0_i32 : i32, i32
  }
}

</mosaic_0001>

<llo_original>
// kernel: mlp_forward.1
$region0: #{mlp_forward.1}
  #allocation0 [shape = 'u32[]', space=smem, size = 0x4, offset = 0x4, fixed_abs, tag = 'smem constant byte address 0x4 - core index']
  #allocation1 [shape = 'u32[144,128]{1,0:T(1,128)}', space=vmem, size = 0x12000, scoped, tag = 'internal scratch']
  %s0 = inlined_call_operand.vmem [shape: f32[8,128], index: 0, kind: input, shape index: {}]
  %s1 = inlined_call_operand.hbm [shape: bf16[11,128,128], index: 1, kind: input, shape index: {}]
  %s2 = inlined_call_operand.vmem [shape: f32[10,1,128], index: 2, kind: input, shape index: {}]
  %s3 = inlined_call_operand.vmem [shape: f32[8,128], index: 3, kind: output, shape index: {}]
  %s4 = sld [smem:[#allocation0]]
  $region26: #{mlp_forward.1} parent=0
    _
  %s6 = ssub.s32 1, %s4
  %s7 = scalar_select 0, %s6, %s4
  $region1: #{mlp_forward.1} parent=0
    #allocation2 [shape = 'u8[360448]{0}', space=vmem, size = 0x58000, scoped, tag = 'input window, operand 1, single buffered']
    #allocation3 [shape = 's32[1]{0}', space=sflag, size = 0x4, scoped, tag = 'scoped memory for mlp_forward.1']
    %8 = vsyncpa [#allocation3], 0
    // Predicated region
    $region2: #{mlp_forward.1} parent=1 // pred_check
      _
    $region3: #{mlp_forward.1} parent=1 // pred_check_branch
      %10 = sbr.rel (0) target = $region5
    $region4: #{mlp_forward.1} parent=1 // pred_region
      _
    $region5: #{mlp_forward.1} parent=1 // pred_fallthru
      _
    // Predicated region
    $region6: #{mlp_forward.1} parent=1 // pred_check
      _
    $region7: #{mlp_forward.1} parent=1 // pred_check_branch
      %12 = sbr.rel (0) target = $region9
    $region8: #{mlp_forward.1} parent=1 // pred_region
      %s14 = ssub.s32 11264, 11264
      %15 = vsyncadd [#allocation3], %s14
      %s16 = sshll.u32 [#allocation2], 4
      %s17 = int_to_ptr.vmem [resolvable:$true] %s16
      %22 = dma.hbm_to_vmem [thread:$0]  %s1, 11264, %s17, [#allocation3], 64, 64, 4
    $region9: #{mlp_forward.1} parent=1 // pred_fallthru
      _
    // Predicated region
    $region10: #{mlp_forward.1} parent=1 // pred_check
      _
    $region11: #{mlp_forward.1} parent=1 // pred_check_branch
      %24 = sbr.rel (0) target = $region13
    $region12: #{mlp_forward.1} parent=1 // pred_region
      _
    $region13: #{mlp_forward.1} parent=1 // pred_fallthru
      _
    // Predicated region
    $region14: #{mlp_forward.1} parent=1 // pred_check
      _
    $region15: #{mlp_forward.1} parent=1 // pred_check_branch
      %26 = sbr.rel (0) target = $region17
    $region16: #{mlp_forward.1} parent=1 // pred_region
      %27 = dma.done [#allocation3], 11264
    $region17: #{mlp_forward.1} parent=1 // pred_fallthru
      _
    %v29 = vld [vmem:[%s0] sm:$0xff]
    %v30 = vpack.c.bf16 %v29, %v29
    %v31 = vld [vmem:[#allocation2] sm:$0xf]
    %v32 = vld [vmem:[#allocation2 + $0x4] sm:$0xf]
    %v33 = vld [vmem:[#allocation2 + $0x8] sm:$0xf]
    %v34 = vld [vmem:[#allocation2 + $0xc] sm:$0xf]
    %v35 = vld [vmem:[#allocation2 + $0x10] sm:$0xf]
    %v36 = vld [vmem:[#allocation2 + $0x14] sm:$0xf]
    %v37 = vld [vmem:[#allocation2 + $0x18] sm:$0xf]
    %v38 = vld [vmem:[#allocation2 + $0x1c] sm:$0xf]
    %v39 = vld [vmem:[#allocation2 + $0x20] sm:$0xf]
    %v40 = vld [vmem:[#allocation2 + $0x24] sm:$0xf]
    %v41 = vld [vmem:[#allocation2 + $0x28] sm:$0xf]
    %v42 = vld [vmem:[#allocation2 + $0x2c] sm:$0xf]
    %v43 = vld [vmem:[#allocation2 + $0x30] sm:$0xf]
    %v44 = vld [vmem:[#allocation2 + $0x34] sm:$0xf]
    %v45 = vld [vmem:[#allocation2 + $0x38] sm:$0xf]
    %v46 = vld [vmem:[#allocation2 + $0x3c] sm:$0xf]
    %v47 = vld [vmem:[%s2] sm:$0x1]
    %v49 = vlaneseq
    %v50 = vshrl.u32 %v49, 7
    %v51 = vsub.s32 0, %v50
    %v52 = vrot.slane %v47, %v51
    %v70 = vunpack.c.l.b16 %v31
    %v71 = vunpack.c.l.b16 %v32
    %v72 = vunpack.c.l.b16 %v33
    %v73 = vunpack.c.l.b16 %v34
    %v74 = vunpack.c.l.b16 %v35
    %v75 = vunpack.c.l.b16 %v36
    %v76 = vunpack.c.l.b16 %v37
    %v77 = vunpack.c.l.b16 %v38
    %v78 = vunpack.c.l.b16 %v39
    %v79 = vunpack.c.l.b16 %v40
    %v80 = vunpack.c.l.b16 %v41
    %v81 = vunpack.c.l.b16 %v42
    %v82 = vunpack.c.l.b16 %v43
    %v83 = vunpack.c.l.b16 %v44
    %v84 = vunpack.c.l.b16 %v45
    %v85 = vunpack.c.l.b16 %v46
    %v86 = vpack.c.b16 %v71, %v70
    %v87 = vpack.c.b16 %v73, %v72
    %v88 = vpack.c.b16 %v75, %v74
    %v89 = vpack.c.b16 %v77, %v76
    %v90 = vpack.c.b16 %v79, %v78
    %v91 = vpack.c.b16 %v81, %v80
    %v92 = vpack.c.b16 %v83, %v82
    %v93 = vpack.c.b16 %v85, %v84
    %102 = vmatprep.subr.bf16.mxu0 0
    %103 = vmatpush1.bf16.msra.mxu0 %v86
    %104 = vmatprep.subr.bf16.mxu0 0
    %105 = vmatpush1.bf16.msra.mxu0 %v87
    %106 = vmatprep.subr.bf16.mxu0 0
    %107 = vmatpush1.bf16.msra.mxu0 %v88
    %108 = vmatprep.subr.bf16.mxu0 0
    %109 = vmatpush1.bf16.msra.mxu0 %v89
    %110 = vmatprep.subr.bf16.mxu0 0
    %111 = vmatpush1.bf16.msra.mxu0 %v90
    %112 = vmatprep.subr.bf16.mxu0 0
    %113 = vmatpush1.bf16.msra.mxu0 %v91
    %114 = vmatprep.subr.bf16.mxu0 0
    %115 = vmatpush1.bf16.msra.mxu0 %v92
    %116 = vmatprep.subr.bf16.mxu0 0
    %117 = vmatpush1.bf16.msra.mxu0 %v93
    %118 = vmatprep.subr.bf16.mxu0 0
    %119 = vmatpush1.bf16.msra.mxu0 0
    %120 = vmatprep.subr.bf16.mxu0 0
    %121 = vmatpush1.bf16.msra.mxu0 0
    %122 = vmatprep.subr.bf16.mxu0 0
    %123 = vmatpush1.bf16.msra.mxu0 0
    %124 = vmatprep.subr.bf16.mxu0 0
    %125 = vmatpush1.bf16.msra.mxu0 0
    %126 = vmatprep.subr.bf16.mxu0 0
    %127 = vmatpush1.bf16.msra.mxu0 0
    %128 = vmatprep.subr.bf16.mxu0 0
    %129 = vmatpush1.bf16.msra.mxu0 0
    %130 = vmatprep.subr.bf16.mxu0 0
    %131 = vmatpush1.bf16.msra.mxu0 0
    %132 = vmatprep.subr.bf16.mxu0 0
    %133 = vmatpush1.bf16.msra.mxu0 0
    %134 = vmatprep.mubr.bf16.mxu0 0
    %135 = vmatmul.mubr.bf16.gmra.mrb[0].mxu0 %v30
    %v136 = vpop.f32.mrb[0].mxu0
    %v137 = vadd.f32 %v52, %v136
    %v138 = vpop.f32.mrb[0].mxu0
    %v139 = vpop.f32.mrb[0].mxu0
    %v140 = vpop.f32.mrb[0].mxu0
    %141 = vdwg.mxu0
    %v142 = vmax.f32 %v137, 0.0
    %v143 = vpack.c.bf16 %v142, %v142
    %s144 = scalar_lea.vmem [#allocation2], 64
    %v145 = vld [vmem:[%s144] sm:$0xf]
    %v146 = vld [vmem:[%s144 + $0x4] sm:$0xf]
    %v147 = vld [vmem:[%s144 + $0x8] sm:$0xf]
    %v148 = vld [vmem:[%s144 + $0xc] sm:$0xf]
    %v149 = vld [vmem:[%s144 + $0x10] sm:$0xf]
    %v150 = vld [vmem:[%s144 + $0x14] sm:$0xf]
    %v151 = vld [vmem:[%s144 + $0x18] sm:$0xf]
    %v152 = vld [vmem:[%s144 + $0x1c] sm:$0xf]
    %v153 = vld [vmem:[%s144 + $0x20] sm:$0xf]
    %v154 = vld [vmem:[%s144 + $0x24] sm:$0xf]
    %v155 = vld [vmem:[%s144 + $0x28] sm:$0xf]
    %v156 = vld [vmem:[%s144 + $0x2c] sm:$0xf]
    %v157 = vld [vmem:[%s144 + $0x30] sm:$0xf]
    %v158 = vld [vmem:[%s144 + $0x34] sm:$0xf]
    %v159 = vld [vmem:[%s144 + $0x38] sm:$0xf]
    %v160 = vld [vmem:[%s144 + $0x3c] sm:$0xf]
    %s161 = scalar_lea.vmem %s2, 1
    %v162 = vld [vmem:[%s161] sm:$0x1]
    %v164 = vlaneseq
    %v165 = vshrl.u32 %v164, 7
    %v166 = vsub.s32 0, %v165
    %v167 = vrot.slane %v162, %v166
    %v185 = vunpack.c.l.b16 %v145
    %v186 = vunpack.c.l.b16 %v146
    %v187 = vunpack.c.l.b16 %v147
    %v188 = vunpack.c.l.b16 %v148
    %v189 = vunpack.c.l.b16 %v149
    %v190 = vunpack.c.l.b16 %v150
    %v191 = vunpack.c.l.b16 %v151
    %v192 = vunpack.c.l.b16 %v152
    %v193 = vunpack.c.l.b16 %v153
    %v194 = vunpack.c.l.b16 %v154
    %v195 = vunpack.c.l.b16 %v155
    %v196 = vunpack.c.l.b16 %v156
    %v197 = vunpack.c.l.b16 %v157
    %v198 = vunpack.c.l.b16 %v158
    %v199 = vunpack.c.l.b16 %v159
    %v200 = vunpack.c.l.b16 %v160
    %v201 = vpack.c.b16 %v186, %v185
    %v202 = vpack.c.b16 %v188, %v187
    %v203 = vpack.c.b16 %v190, %v189
    %v204 = vpack.c.b16 %v192, %v191
    %v205 = vpack.c.b16 %v194, %v193
    %v206 = vpack.c.b16 %v196, %v195
    %v207 = vpack.c.b16 %v198, %v197
    %v208 = vpack.c.b16 %v200, %v199
    %217 = vmatprep.subr.bf16.mxu0 0
    %218 = vmatpush1.bf16.msra.mxu0 %v201
    %219 = vmatprep.subr.bf16.mxu0 0
    %220 = vmatpush1.bf16.msra.mxu0 %v202
    %221 = vmatprep.subr.bf16.mxu0 0
    %222 = vmatpush1.bf16.msra.mxu0 %v203
    %223 = vmatprep.subr.bf16.mxu0 0
    %224 = vmatpush1.bf16.msra.mxu0 %v204
    %225 = vmatprep.subr.bf16.mxu0 0
    %226 = vmatpush1.bf16.msra.mxu0 %v205
    %227 = vmatprep.subr.bf16.mxu0 0
    %228 = vmatpush1.bf16.msra.mxu0 %v206
    %229 = vmatprep.subr.bf16.mxu0 0
    %230 = vmatpush1.bf16.msra.mxu0 %v207
    %231 = vmatprep.subr.bf16.mxu0 0
    %232 = vmatpush1.bf16.msra.mxu0 %v208
    %233 = vmatprep.subr.bf16.mxu0 0
    %234 = vmatpush1.bf16.msra.mxu0 0
    %235 = vmatprep.subr.bf16.mxu0 0
    %236 = vmatpush1.bf16.msra.mxu0 0
    %237 = vmatprep.subr.bf16.mxu0 0
    %238 = vmatpush1.bf16.msra.mxu0 0
    %239 = vmatprep.subr.bf16.mxu0 0
    %240 = vmatpush1.bf16.msra.mxu0 0
    %241 = vmatprep.subr.bf16.mxu0 0
    %242 = vmatpush1.bf16.msra.mxu0 0
    %243 = vmatprep.subr.bf16.mxu0 0
    %244 = vmatpush1.bf16.msra.mxu0 0
    %245 = vmatprep.subr.bf16.mxu0 0
    %246 = vmatpush1.bf16.msra.mxu0 0
    %247 = vmatprep.subr.bf16.mxu0 0
    %248 = vmatpush1.bf16.msra.mxu0 0
    %249 = vmatprep.mubr.bf16.mxu0 0
    %250 = vmatmul.mubr.bf16.gmra.mrb[0].mxu0 %v143
    %v251 = vpop.f32.mrb[0].mxu0
    %v252 = vadd.f32 %v167, %v251
    %v253 = vpop.f32.mrb[0].mxu0
    %v254 = vpop.f32.mrb[0].mxu0
    %v255 = vpop.f32.mrb[0].mxu0
    %256 = vdwg.mxu0
    %v257 = vmax.f32 %v252, 0.0
    %v258 = vpack.c.bf16 %v257, %v257
    %s259 = scalar_lea.vmem [#allocation2], 128
    %v260 = vld [vmem:[%s259] sm:$0xf]
    %v261 = vld [vmem:[%s259 + $0x4] sm:$0xf]
    %v262 = vld [vmem:[%s259 + $0x8] sm:$0xf]
    %v263 = vld [vmem:[%s259 + $0xc] sm:$0xf]
    %v264 = vld [vmem:[%s259 + $0x10] sm:$0xf]
    %v265 = vld [vmem:[%s259 + $0x14] sm:$0xf]
    %v266 = vld [vmem:[%s259 + $0x18] sm:$0xf]
    %v267 = vld [vmem:[%s259 + $0x1c] sm:$0xf]
    %v268 = vld [vmem:[%s259 + $0x20] sm:$0xf]
    %v269 = vld [vmem:[%s259 + $0x24] sm:$0xf]
    %v270 = vld [vmem:[%s259 + $0x28] sm:$0xf]
    %v271 = vld [vmem:[%s259 + $0x2c] sm:$0xf]
    %v272 = vld [vmem:[%s259 + $0x30] sm:$0xf]
    %v273 = vld [vmem:[%s259 + $0x34] sm:$0xf]
    %v274 = vld [vmem:[%s259 + $0x38] sm:$0xf]
    %v275 = vld [vmem:[%s259 + $0x3c] sm:$0xf]
    %s276 = scalar_lea.vmem %s2, 2
    %v277 = vld [vmem:[%s276] sm:$0x1]
    %v279 = vlaneseq
    %v280 = vshrl.u32 %v279, 7
    %v281 = vsub.s32 0, %v280
    %v282 = vrot.slane %v277, %v281
    %v300 = vunpack.c.l.b16 %v260
    %v301 = vunpack.c.l.b16 %v261
    %v302 = vunpack.c.l.b16 %v262
    %v303 = vunpack.c.l.b16 %v263
    %v304 = vunpack.c.l.b16 %v264
    %v305 = vunpack.c.l.b16 %v265
    %v306 = vunpack.c.l.b16 %v266
    %v307 = vunpack.c.l.b16 %v267
    %v308 = vunpack.c.l.b16 %v268
    %v309 = vunpack.c.l.b16 %v269
    %v310 = vunpack.c.l.b16 %v270
    %v311 = vunpack.c.l.b16 %v271
    %v312 = vunpack.c.l.b16 %v272
    %v313 = vunpack.c.l.b16 %v273
    %v314 = vunpack.c.l.b16 %v274
    %v315 = vunpack.c.l.b16 %v275
    %v316 = vpack.c.b16 %v301, %v300
    %v317 = vpack.c.b16 %v303, %v302
    %v318 = vpack.c.b16 %v305, %v304
    %v319 = vpack.c.b16 %v307, %v306
    %v320 = vpack.c.b16 %v309, %v308
    %v321 = vpack.c.b16 %v311, %v310
    %v322 = vpack.c.b16 %v313, %v312
    %v323 = vpack.c.b16 %v315, %v314
    %332 = vmatprep.subr.bf16.mxu0 0
    %333 = vmatpush1.bf16.msra.mxu0 %v316
    %334 = vmatprep.subr.bf16.mxu0 0
    %335 = vmatpush1.bf16.msra.mxu0 %v317
    %336 = vmatprep.subr.bf16.mxu0 0
    %337 = vmatpush1.bf16.msra.mxu0 %v318
    %338 = vmatprep.subr.bf16.mxu0 0
    %339 = vmatpush1.bf16.msra.mxu0 %v319
    %340 = vmatprep.subr.bf16.mxu0 0
    %341 = vmatpush1.bf16.msra.mxu0 %v320
    %342 = vmatprep.subr.bf16.mxu0 0
    %343 = vmatpush1.bf16.msra.mxu0 %v321
    %344 = vmatprep.subr.bf16.mxu0 0
    %345 = vmatpush1.bf16.msra.mxu0 %v322
    %346 = vmatprep.subr.bf16.mxu0 0
    %347 = vmatpush1.bf16.msra.mxu0 %v323
    %348 = vmatprep.subr.bf16.mxu0 0
    %349 = vmatpush1.bf16.msra.mxu0 0
    %350 = vmatprep.subr.bf16.mxu0 0
    %351 = vmatpush1.bf16.msra.mxu0 0
    %352 = vmatprep.subr.bf16.mxu0 0
    %353 = vmatpush1.bf16.msra.mxu0 0
    %354 = vmatprep.subr.bf16.mxu0 0
    %355 = vmatpush1.bf16.msra.mxu0 0
    %356 = vmatprep.subr.bf16.mxu0 0
    %357 = vmatpush1.bf16.msra.mxu0 0
    %358 = vmatprep.subr.bf16.mxu0 0
    %359 = vmatpush1.bf16.msra.mxu0 0
    %360 = vmatprep.subr.bf16.mxu0 0
    %361 = vmatpush1.bf16.msra.mxu0 0
    %362 = vmatprep.subr.bf16.mxu0 0
    %363 = vmatpush1.bf16.msra.mxu0 0
    %364 = vmatprep.mubr.bf16.mxu0 0
    %365 = vmatmul.mubr.bf16.gmra.mrb[0].mxu0 %v258
    %v366 = vpop.f32.mrb[0].mxu0
    %v367 = vadd.f32 %v282, %v366
    %v368 = vpop.f32.mrb[0].mxu0
    %v369 = vpop.f32.mrb[0].mxu0
    %v370 = vpop.f32.mrb[0].mxu0
    %371 = vdwg.mxu0
    %v372 = vmax.f32 %v367, 0.0
    %v373 = vpack.c.bf16 %v372, %v372
    %s374 = scalar_lea.vmem [#allocation2], 192
    %v375 = vld [vmem:[%s374] sm:$0xf]
    %v376 = vld [vmem:[%s374 + $0x4] sm:$0xf]
    %v377 = vld [vmem:[%s374 + $0x8] sm:$0xf]
    %v378 = vld [vmem:[%s374 + $0xc] sm:$0xf]
    %v379 = vld [vmem:[%s374 + $0x10] sm:$0xf]
    %v380 = vld [vmem:[%s374 + $0x14] sm:$0xf]
    %v381 = vld [vmem:[%s374 + $0x18] sm:$0xf]
    %v382 = vld [vmem:[%s374 + $0x1c] sm:$0xf]
    %v383 = vld [vmem:[%s374 + $0x20] sm:$0xf]
    %v384 = vld [vmem:[%s374 + $0x24] sm:$0xf]
    %v385 = vld [vmem:[%s374 + $0x28] sm:$0xf]
    %v386 = vld [vmem:[%s374 + $0x2c] sm:$0xf]
    %v387 = vld [vmem:[%s374 + $0x30] sm:$0xf]
    %v388 = vld [vmem:[%s374 + $0x34] sm:$0xf]
    %v389 = vld [vmem:[%s374 + $0x38] sm:$0xf]
    %v390 = vld [vmem:[%s374 + $0x3c] sm:$0xf]
    %s391 = scalar_lea.vmem %s2, 3
    %v392 = vld [vmem:[%s391] sm:$0x1]
    %v394 = vlaneseq
    %v395 = vshrl.u32 %v394, 7
    %v396 = vsub.s32 0, %v395
    %v397 = vrot.slane %v392, %v396
    %v415 = vunpack.c.l.b16 %v375
    %v416 = vunpack.c.l.b16 %v376
    %v417 = vunpack.c.l.b16 %v377
    %v418 = vunpack.c.l.b16 %v378
    %v419 = vunpack.c.l.b16 %v379
    %v420 = vunpack.c.l.b16 %v380
    %v421 = vunpack.c.l.b16 %v381
    %v422 = vunpack.c.l.b16 %v382
    %v423 = vunpack.c.l.b16 %v383
    %v424 = vunpack.c.l.b16 %v384
    %v425 = vunpack.c.l.b16 %v385
    %v426 = vunpack.c.l.b16 %v386
    %v427 = vunpack.c.l.b16 %v387
    %v428 = vunpack.c.l.b16 %v388
    %v429 = vunpack.c.l.b16 %v389
    %v430 = vunpack.c.l.b16 %v390
    %v431 = vpack.c.b16 %v416, %v415
    %v432 = vpack.c.b16 %v418, %v417
    %v433 = vpack.c.b16 %v420, %v419
    %v434 = vpack.c.b16 %v422, %v421
    %v435 = vpack.c.b16 %v424, %v423
    %v436 = vpack.c.b16 %v426, %v425
    %v437 = vpack.c.b16 %v428, %v427
    %v438 = vpack.c.b16 %v430, %v429
    %447 = vmatprep.subr.bf16.mxu0 0
    %448 = vmatpush1.bf16.msra.mxu0 %v431
    %449 = vmatprep.subr.bf16.mxu0 0
    %450 = vmatpush1.bf16.msra.mxu0 %v432
    %451 = vmatprep.subr.bf16.mxu0 0
    %452 = vmatpush1.bf16.msra.mxu0 %v433
    %453 = vmatprep.subr.bf16.mxu0 0
    %454 = vmatpush1.bf16.msra.mxu0 %v434
    %455 = vmatprep.subr.bf16.mxu0 0
    %456 = vmatpush1.bf16.msra.mxu0 %v435
    %457 = vmatprep.subr.bf16.mxu0 0
    %458 = vmatpush1.bf16.msra.mxu0 %v436
    %459 = vmatprep.subr.bf16.mxu0 0
    %460 = vmatpush1.bf16.msra.mxu0 %v437
    %461 = vmatprep.subr.bf16.mxu0 0
    %462 = vmatpush1.bf16.msra.mxu0 %v438
    %463 = vmatprep.subr.bf16.mxu0 0
    %464 = vmatpush1.bf16.msra.mxu0 0
    %465 = vmatprep.subr.bf16.mxu0 0
    %466 = vmatpush1.bf16.msra.mxu0 0
    %467 = vmatprep.subr.bf16.mxu0 0
    %468 = vmatpush1.bf16.msra.mxu0 0
    %469 = vmatprep.subr.bf16.mxu0 0
    %470 = vmatpush1.bf16.msra.mxu0 0
    %471 = vmatprep.subr.bf16.mxu0 0
    %472 = vmatpush1.bf16.msra.mxu0 0
    %473 = vmatprep.subr.bf16.mxu0 0
    %474 = vmatpush1.bf16.msra.mxu0 0
    %475 = vmatprep.subr.bf16.mxu0 0
    %476 = vmatpush1.bf16.msra.mxu0 0
    %477 = vmatprep.subr.bf16.mxu0 0
    %478 = vmatpush1.bf16.msra.mxu0 0
    %479 = vmatprep.mubr.bf16.mxu0 0
    %480 = vmatmul.mubr.bf16.gmra.mrb[0].mxu0 %v373
    %v481 = vpop.f32.mrb[0].mxu0
    %v482 = vadd.f32 %v397, %v481
    %v483 = vpop.f32.mrb[0].mxu0
    %v484 = vpop.f32.mrb[0].mxu0
    %v485 = vpop.f32.mrb[0].mxu0
    %486 = vdwg.mxu0
    %v487 = vmax.f32 %v482, 0.0
    %v488 = vpack.c.bf16 %v487, %v487
    %s489 = scalar_lea.vmem [#allocation2], 256
    %v490 = vld [vmem:[%s489] sm:$0xf]
    %v491 = vld [vmem:[%s489 + $0x4] sm:$0xf]
    %v492 = vld [vmem:[%s489 + $0x8] sm:$0xf]
    %v493 = vld [vmem:[%s489 + $0xc] sm:$0xf]
    %v494 = vld [vmem:[%s489 + $0x10] sm:$0xf]
    %v495 = vld [vmem:[%s489 + $0x14] sm:$0xf]
    %v496 = vld [vmem:[%s489 + $0x18] sm:$0xf]
    %v497 = vld [vmem:[%s489 + $0x1c] sm:$0xf]
    %v498 = vld [vmem:[%s489 + $0x20] sm:$0xf]
    %v499 = vld [vmem:[%s489 + $0x24] sm:$0xf]
    %v500 = vld [vmem:[%s489 + $0x28] sm:$0xf]
    %v501 = vld [vmem:[%s489 + $0x2c] sm:$0xf]
    %v502 = vld [vmem:[%s489 + $0x30] sm:$0xf]
    %v503 = vld [vmem:[%s489 + $0x34] sm:$0xf]
    %v504 = vld [vmem:[%s489 + $0x38] sm:$0xf]
    %v505 = vld [vmem:[%s489 + $0x3c] sm:$0xf]
    %s506 = scalar_lea.vmem %s2, 4
    %v507 = vld [vmem:[%s506] sm:$0x1]
    %v509 = vlaneseq
    %v510 = vshrl.u32 %v509, 7
    %v511 = vsub.s32 0, %v510
    %v512 = vrot.slane %v507, %v511
    %v530 = vunpack.c.l.b16 %v490
    %v531 = vunpack.c.l.b16 %v491
    %v532 = vunpack.c.l.b16 %v492
    %v533 = vunpack.c.l.b16 %v493
    %v534 = vunpack.c.l.b16 %v494
    %v535 = vunpack.c.l.b16 %v495
    %v536 = vunpack.c.l.b16 %v496
    %v537 = vunpack.c.l.b16 %v497
    %v538 = vunpack.c.l.b16 %v498
    %v539 = vunpack.c.l.b16 %v499
    %v540 = vunpack.c.l.b16 %v500
    %v541 = vunpack.c.l.b16 %v501
    %v542 = vunpack.c.l.b16 %v502
    %v543 = vunpack.c.l.b16 %v503
    %v544 = vunpack.c.l.b16 %v504
    %v545 = vunpack.c.l.b16 %v505
    %v546 = vpack.c.b16 %v531, %v530
    %v547 = vpack.c.b16 %v533, %v532
    %v548 = vpack.c.b16 %v535, %v534
    %v549 = vpack.c.b16 %v537, %v536
    %v550 = vpack.c.b16 %v539, %v538
    %v551 = vpack.c.b16 %v541, %v540
    %v552 = vpack.c.b16 %v543, %v542
    %v553 = vpack.c.b16 %v545, %v544
    %562 = vmatprep.subr.bf16.mxu0 0
    %563 = vmatpush1.bf16.msra.mxu0 %v546
    %564 = vmatprep.subr.bf16.mxu0 0
    %565 = vmatpush1.bf16.msra.mxu0 %v547
    %566 = vmatprep.subr.bf16.mxu0 0
    %567 = vmatpush1.bf16.msra.mxu0 %v548
    %568 = vmatprep.subr.bf16.mxu0 0
    %569 = vmatpush1.bf16.msra.mxu0 %v549
    %570 = vmatprep.subr.bf16.mxu0 0
    %571 = vmatpush1.bf16.msra.mxu0 %v550
    %572 = vmatprep.subr.bf16.mxu0 0
    %573 = vmatpush1.bf16.msra.mxu0 %v551
    %574 = vmatprep.subr.bf16.mxu0 0
    %575 = vmatpush1.bf16.msra.mxu0 %v552
    %576 = vmatprep.subr.bf16.mxu0 0
    %577 = vmatpush1.bf16.msra.mxu0 %v553
    %578 = vmatprep.subr.bf16.mxu0 0
    %579 = vmatpush1.bf16.msra.mxu0 0
    %580 = vmatprep.subr.bf16.mxu0 0
    %581 = vmatpush1.bf16.msra.mxu0 0
    %582 = vmatprep.subr.bf16.mxu0 0
    %583 = vmatpush1.bf16.msra.mxu0 0
    %584 = vmatprep.subr.bf16.mxu0 0
    %585 = vmatpush1.bf16.msra.mxu0 0
    %586 = vmatprep.subr.bf16.mxu0 0
    %587 = vmatpush1.bf16.msra.mxu0 0
    %588 = vmatprep.subr.bf16.mxu0 0
    %589 = vmatpush1.bf16.msra.mxu0 0
    %590 = vmatprep.subr.bf16.mxu0 0
    %591 = vmatpush1.bf16.msra.mxu0 0
    %592 = vmatprep.subr.bf16.mxu0 0
    %593 = vmatpush1.bf16.msra.mxu0 0
    %594 = vmatprep.mubr.bf16.mxu0 0
    %595 = vmatmul.mubr.bf16.gmra.mrb[0].mxu0 %v488
    %v596 = vpop.f32.mrb[0].mxu0
    %v597 = vadd.f32 %v512, %v596
    %v598 = vpop.f32.mrb[0].mxu0
    %v599 = vpop.f32.mrb[0].mxu0
    %v600 = vpop.f32.mrb[0].mxu0
    %601 = vdwg.mxu0
    %v602 = vmax.f32 %v597, 0.0
    %v603 = vpack.c.bf16 %v602, %v602
    %s604 = scalar_lea.vmem [#allocation2], 320
    %v605 = vld [vmem:[%s604] sm:$0xf]
    %v606 = vld [vmem:[%s604 + $0x4] sm:$0xf]
    %v607 = vld [vmem:[%s604 + $0x8] sm:$0xf]
    %v608 = vld [vmem:[%s604 + $0xc] sm:$0xf]
    %v609 = vld [vmem:[%s604 + $0x10] sm:$0xf]
    %v610 = vld [vmem:[%s604 + $0x14] sm:$0xf]
    %v611 = vld [vmem:[%s604 + $0x18] sm:$0xf]
    %v612 = vld [vmem:[%s604 + $0x1c] sm:$0xf]
    %v613 = vld [vmem:[%s604 + $0x20] sm:$0xf]
    %v614 = vld [vmem:[%s604 + $0x24] sm:$0xf]
    %v615 = vld [vmem:[%s604 + $0x28] sm:$0xf]
    %v616 = vld [vmem:[%s604 + $0x2c] sm:$0xf]
    %v617 = vld [vmem:[%s604 + $0x30] sm:$0xf]
    %v618 = vld [vmem:[%s604 + $0x34] sm:$0xf]
    %v619 = vld [vmem:[%s604 + $0x38] sm:$0xf]
    %v620 = vld [vmem:[%s604 + $0x3c] sm:$0xf]
    %s621 = scalar_lea.vmem %s2, 5
    %v622 = vld [vmem:[%s621] sm:$0x1]
    %v624 = vlaneseq
    %v625 = vshrl.u32 %v624, 7
    %v626 = vsub.s32 0, %v625
    %v627 = vrot.slane %v622, %v626
    %v645 = vunpack.c.l.b16 %v605
    %v646 = vunpack.c.l.b16 %v606
    %v647 = vunpack.c.l.b16 %v607
    %v648 = vunpack.c.l.b16 %v608
    %v649 = vunpack.c.l.b16 %v609
    %v650 = vunpack.c.l.b16 %v610
    %v651 = vunpack.c.l.b16 %v611
    %v652 = vunpack.c.l.b16 %v612
    %v653 = vunpack.c.l.b16 %v613
    %v654 = vunpack.c.l.b16 %v614
    %v655 = vunpack.c.l.b16 %v615
    %v656 = vunpack.c.l.b16 %v616
    %v657 = vunpack.c.l.b16 %v617
    %v658 = vunpack.c.l.b16 %v618
    %v659 = vunpack.c.l.b16 %v619
    %v660 = vunpack.c.l.b16 %v620
    %v661 = vpack.c.b16 %v646, %v645
    %v662 = vpack.c.b16 %v648, %v647
    %v663 = vpack.c.b16 %v650, %v649
    %v664 = vpack.c.b16 %v652, %v651
    %v665 = vpack.c.b16 %v654, %v653
    %v666 = vpack.c.b16 %v656, %v655
    %v667 = vpack.c.b16 %v658, %v657
    %v668 = vpack.c.b16 %v660, %v659
    %677 = vmatprep.subr.bf16.mxu0 0
    %678 = vmatpush1.bf16.msra.mxu0 %v661
    %679 = vmatprep.subr.bf16.mxu0 0
    %680 = vmatpush1.bf16.msra.mxu0 %v662
    %681 = vmatprep.subr.bf16.mxu0 0
    %682 = vmatpush1.bf16.msra.mxu0 %v663
    %683 = vmatprep.subr.bf16.mxu0 0
    %684 = vmatpush1.bf16.msra.mxu0 %v664
    %685 = vmatprep.subr.bf16.mxu0 0
    %686 = vmatpush1.bf16.msra.mxu0 %v665
    %687 = vmatprep.subr.bf16.mxu0 0
    %688 = vmatpush1.bf16.msra.mxu0 %v666
    %689 = vmatprep.subr.bf16.mxu0 0
    %690 = vmatpush1.bf16.msra.mxu0 %v667
    %691 = vmatprep.subr.bf16.mxu0 0
    %692 = vmatpush1.bf16.msra.mxu0 %v668
    %693 = vmatprep.subr.bf16.mxu0 0
    %694 = vmatpush1.bf16.msra.mxu0 0
    %695 = vmatprep.subr.bf16.mxu0 0
    %696 = vmatpush1.bf16.msra.mxu0 0
    %697 = vmatprep.subr.bf16.mxu0 0
    %698 = vmatpush1.bf16.msra.mxu0 0
    %699 = vmatprep.subr.bf16.mxu0 0
    %700 = vmatpush1.bf16.msra.mxu0 0
    %701 = vmatprep.subr.bf16.mxu0 0
    %702 = vmatpush1.bf16.msra.mxu0 0
    %703 = vmatprep.subr.bf16.mxu0 0
    %704 = vmatpush1.bf16.msra.mxu0 0
    %705 = vmatprep.subr.bf16.mxu0 0
    %706 = vmatpush1.bf16.msra.mxu0 0
    %707 = vmatprep.subr.bf16.mxu0 0
    %708 = vmatpush1.bf16.msra.mxu0 0
    %709 = vmatprep.mubr.bf16.mxu0 0
    %710 = vmatmul.mubr.bf16.gmra.mrb[0].mxu0 %v603
    %v711 = vpop.f32.mrb[0].mxu0
    %v712 = vadd.f32 %v627, %v711
    %v713 = vpop.f32.mrb[0].mxu0
    %v714 = vpop.f32.mrb[0].mxu0
    %v715 = vpop.f32.mrb[0].mxu0
    %716 = vdwg.mxu0
    %v717 = vmax.f32 %v712, 0.0
    %v718 = vpack.c.bf16 %v717, %v717
    %s719 = scalar_lea.vmem [#allocation2], 384
    %v720 = vld [vmem:[%s719] sm:$0xf]
    %v721 = vld [vmem:[%s719 + $0x4] sm:$0xf]
    %v722 = vld [vmem:[%s719 + $0x8] sm:$0xf]
    %v723 = vld [vmem:[%s719 + $0xc] sm:$0xf]
    %v724 = vld [vmem:[%s719 + $0x10] sm:$0xf]
    %v725 = vld [vmem:[%s719 + $0x14] sm:$0xf]
    %v726 = vld [vmem:[%s719 + $0x18] sm:$0xf]
    %v727 = vld [vmem:[%s719 + $0x1c] sm:$0xf]
    %v728 = vld [vmem:[%s719 + $0x20] sm:$0xf]
    %v729 = vld [vmem:[%s719 + $0x24] sm:$0xf]
    %v730 = vld [vmem:[%s719 + $0x28] sm:$0xf]
    %v731 = vld [vmem:[%s719 + $0x2c] sm:$0xf]
    %v732 = vld [vmem:[%s719 + $0x30] sm:$0xf]
    %v733 = vld [vmem:[%s719 + $0x34] sm:$0xf]
    %v734 = vld [vmem:[%s719 + $0x38] sm:$0xf]
    %v735 = vld [vmem:[%s719 + $0x3c] sm:$0xf]
    %s736 = scalar_lea.vmem %s2, 6
    %v737 = vld [vmem:[%s736] sm:$0x1]
    %v739 = vlaneseq
    %v740 = vshrl.u32 %v739, 7
    %v741 = vsub.s32 0, %v740
    %v742 = vrot.slane %v737, %v741
    %v760 = vunpack.c.l.b16 %v720
    %v761 = vunpack.c.l.b16 %v721
    %v762 = vunpack.c.l.b16 %v722
    %v763 = vunpack.c.l.b16 %v723
    %v764 = vunpack.c.l.b16 %v724
    %v765 = vunpack.c.l.b16 %v725
    %v766 = vunpack.c.l.b16 %v726
    %v767 = vunpack.c.l.b16 %v727
    %v768 = vunpack.c.l.b16 %v728
    %v769 = vunpack.c.l.b16 %v729
    %v770 = vunpack.c.l.b16 %v730
    %v771 = vunpack.c.l.b16 %v731
    %v772 = vunpack.c.l.b16 %v732
    %v773 = vunpack.c.l.b16 %v733
    %v774 = vunpack.c.l.b16 %v734
    %v775 = vunpack.c.l.b16 %v735
    %v776 = vpack.c.b16 %v761, %v760
    %v777 = vpack.c.b16 %v763, %v762
    %v778 = vpack.c.b16 %v765, %v764
    %v779 = vpack.c.b16 %v767, %v766
    %v780 = vpack.c.b16 %v769, %v768
    %v781 = vpack.c.b16 %v771, %v770
    %v782 = vpack.c.b16 %v773, %v772
    %v783 = vpack.c.b16 %v775, %v774
    %792 = vmatprep.subr.bf16.mxu0 0
    %793 = vmatpush1.bf16.msra.mxu0 %v776
    %794 = vmatprep.subr.bf16.mxu0 0
    %795 = vmatpush1.bf16.msra.mxu0 %v777
    %796 = vmatprep.subr.bf16.mxu0 0
    %797 = vmatpush1.bf16.msra.mxu0 %v778
    %798 = vmatprep.subr.bf16.mxu0 0
    %799 = vmatpush1.bf16.msra.mxu0 %v779
    %800 = vmatprep.subr.bf16.mxu0 0
    %801 = vmatpush1.bf16.msra.mxu0 %v780
    %802 = vmatprep.subr.bf16.mxu0 0
    %803 = vmatpush1.bf16.msra.mxu0 %v781
    %804 = vmatprep.subr.bf16.mxu0 0
    %805 = vmatpush1.bf16.msra.mxu0 %v782
    %806 = vmatprep.subr.bf16.mxu0 0
    %807 = vmatpush1.bf16.msra.mxu0 %v783
    %808 = vmatprep.subr.bf16.mxu0 0
    %809 = vmatpush1.bf16.msra.mxu0 0
    %810 = vmatprep.subr.bf16.mxu0 0
    %811 = vmatpush1.bf16.msra.mxu0 0
    %812 = vmatprep.subr.bf16.mxu0 0
    %813 = vmatpush1.bf16.msra.mxu0 0
    %814 = vmatprep.subr.bf16.mxu0 0
    %815 = vmatpush1.bf16.msra.mxu0 0
    %816 = vmatprep.subr.bf16.mxu0 0
    %817 = vmatpush1.bf16.msra.mxu0 0
    %818 = vmatprep.subr.bf16.mxu0 0
    %819 = vmatpush1.bf16.msra.mxu0 0
    %820 = vmatprep.subr.bf16.mxu0 0
    %821 = vmatpush1.bf16.msra.mxu0 0
    %822 = vmatprep.subr.bf16.mxu0 0
    %823 = vmatpush1.bf16.msra.mxu0 0
    %824 = vmatprep.mubr.bf16.mxu0 0
    %825 = vmatmul.mubr.bf16.gmra.mrb[0].mxu0 %v718
    %v826 = vpop.f32.mrb[0].mxu0
    %v827 = vadd.f32 %v742, %v826
    %v828 = vpop.f32.mrb[0].mxu0
    %v829 = vpop.f32.mrb[0].mxu0
    %v830 = vpop.f32.mrb[0].mxu0
    %831 = vdwg.mxu0
    %v832 = vxor.u32 %v827, 2147483648
    %v833 = vmul.f32 %v832, 1.442695
    %v834 = vpow.pop %v833
    %v835 = vadd.f32 %v834, 1.0
    %v836 = vrcp.pop %v835
    %v837 = vmul.f32 1.0, %v836
    %v838 = vpack.c.bf16 %v837, %v837
    %s839 = scalar_lea.vmem [#allocation2], 448
    %v840 = vld [vmem:[%s839] sm:$0xf]
    %v841 = vld [vmem:[%s839 + $0x4] sm:$0xf]
    %v842 = vld [vmem:[%s839 + $0x8] sm:$0xf]
    %v843 = vld [vmem:[%s839 + $0xc] sm:$0xf]
    %v844 = vld [vmem:[%s839 + $0x10] sm:$0xf]
    %v845 = vld [vmem:[%s839 + $0x14] sm:$0xf]
    %v846 = vld [vmem:[%s839 + $0x18] sm:$0xf]
    %v847 = vld [vmem:[%s839 + $0x1c] sm:$0xf]
    %v848 = vld [vmem:[%s839 + $0x20] sm:$0xf]
    %v849 = vld [vmem:[%s839 + $0x24] sm:$0xf]
    %v850 = vld [vmem:[%s839 + $0x28] sm:$0xf]
    %v851 = vld [vmem:[%s839 + $0x2c] sm:$0xf]
    %v852 = vld [vmem:[%s839 + $0x30] sm:$0xf]
    %v853 = vld [vmem:[%s839 + $0x34] sm:$0xf]
    %v854 = vld [vmem:[%s839 + $0x38] sm:$0xf]
    %v855 = vld [vmem:[%s839 + $0x3c] sm:$0xf]
    %s856 = scalar_lea.vmem %s2, 7
    %v857 = vld [vmem:[%s856] sm:$0x1]
    %v859 = vlaneseq
    %v860 = vshrl.u32 %v859, 7
    %v861 = vsub.s32 0, %v860
    %v862 = vrot.slane %v857, %v861
    %v880 = vunpack.c.l.b16 %v840
    %v881 = vunpack.c.l.b16 %v841
    %v882 = vunpack.c.l.b16 %v842
    %v883 = vunpack.c.l.b16 %v843
    %v884 = vunpack.c.l.b16 %v844
    %v885 = vunpack.c.l.b16 %v845
    %v886 = vunpack.c.l.b16 %v846
    %v887 = vunpack.c.l.b16 %v847
    %v888 = vunpack.c.l.b16 %v848
    %v889 = vunpack.c.l.b16 %v849
    %v890 = vunpack.c.l.b16 %v850
    %v891 = vunpack.c.l.b16 %v851
    %v892 = vunpack.c.l.b16 %v852
    %v893 = vunpack.c.l.b16 %v853
    %v894 = vunpack.c.l.b16 %v854
    %v895 = vunpack.c.l.b16 %v855
    %v896 = vpack.c.b16 %v881, %v880
    %v897 = vpack.c.b16 %v883, %v882
    %v898 = vpack.c.b16 %v885, %v884
    %v899 = vpack.c.b16 %v887, %v886
    %v900 = vpack.c.b16 %v889, %v888
    %v901 = vpack.c.b16 %v891, %v890
    %v902 = vpack.c.b16 %v893, %v892
    %v903 = vpack.c.b16 %v895, %v894
    %912 = vmatprep.subr.bf16.mxu0 0
    %913 = vmatpush1.bf16.msra.mxu0 %v896
    %914 = vmatprep.subr.bf16.mxu0 0
    %915 = vmatpush1.bf16.msra.mxu0 %v897
    %916 = vmatprep.subr.bf16.mxu0 0
    %917 = vmatpush1.bf16.msra.mxu0 %v898
    %918 = vmatprep.subr.bf16.mxu0 0
    %919 = vmatpush1.bf16.msra.mxu0 %v899
    %920 = vmatprep.subr.bf16.mxu0 0
    %921 = vmatpush1.bf16.msra.mxu0 %v900
    %922 = vmatprep.subr.bf16.mxu0 0
    %923 = vmatpush1.bf16.msra.mxu0 %v901
    %924 = vmatprep.subr.bf16.mxu0 0
    %925 = vmatpush1.bf16.msra.mxu0 %v902
    %926 = vmatprep.subr.bf16.mxu0 0
    %927 = vmatpush1.bf16.msra.mxu0 %v903
    %928 = vmatprep.subr.bf16.mxu0 0
    %929 = vmatpush1.bf16.msra.mxu0 0
    %930 = vmatprep.subr.bf16.mxu0 0
    %931 = vmatpush1.bf16.msra.mxu0 0
    %932 = vmatprep.subr.bf16.mxu0 0
    %933 = vmatpush1.bf16.msra.mxu0 0
    %934 = vmatprep.subr.bf16.mxu0 0
    %935 = vmatpush1.bf16.msra.mxu0 0
    %936 = vmatprep.subr.bf16.mxu0 0
    %937 = vmatpush1.bf16.msra.mxu0 0
    %938 = vmatprep.subr.bf16.mxu0 0
    %939 = vmatpush1.bf16.msra.mxu0 0
    %940 = vmatprep.subr.bf16.mxu0 0
    %941 = vmatpush1.bf16.msra.mxu0 0
    %942 = vmatprep.subr.bf16.mxu0 0
    %943 = vmatpush1.bf16.msra.mxu0 0
    %944 = vmatprep.mubr.bf16.mxu0 0
    %945 = vmatmul.mubr.bf16.gmra.mrb[0].mxu0 %v838
    %v946 = vpop.f32.mrb[0].mxu0
    %v947 = vadd.f32 %v862, %v946
    %v948 = vpop.f32.mrb[0].mxu0
    %v949 = vpop.f32.mrb[0].mxu0
    %v950 = vpop.f32.mrb[0].mxu0
    %951 = vdwg.mxu0
    %v952 = vxor.u32 %v947, 2147483648
    %v953 = vmul.f32 %v952, 1.442695
    %v954 = vpow.pop %v953
    %v955 = vadd.f32 %v954, 1.0
    %v956 = vrcp.pop %v955
    %v957 = vmul.f32 1.0, %v956
    %v958 = vpack.c.bf16 %v957, %v957
    %s959 = scalar_lea.vmem [#allocation2], 512
    %v960 = vld [vmem:[%s959] sm:$0xf]
    %v961 = vld [vmem:[%s959 + $0x4] sm:$0xf]
    %v962 = vld [vmem:[%s959 + $0x8] sm:$0xf]
    %v963 = vld [vmem:[%s959 + $0xc] sm:$0xf]
    %v964 = vld [vmem:[%s959 + $0x10] sm:$0xf]
    %v965 = vld [vmem:[%s959 + $0x14] sm:$0xf]
    %v966 = vld [vmem:[%s959 + $0x18] sm:$0xf]
    %v967 = vld [vmem:[%s959 + $0x1c] sm:$0xf]
    %v968 = vld [vmem:[%s959 + $0x20] sm:$0xf]
    %v969 = vld [vmem:[%s959 + $0x24] sm:$0xf]
    %v970 = vld [vmem:[%s959 + $0x28] sm:$0xf]
    %v971 = vld [vmem:[%s959 + $0x2c] sm:$0xf]
    %v972 = vld [vmem:[%s959 + $0x30] sm:$0xf]
    %v973 = vld [vmem:[%s959 + $0x34] sm:$0xf]
    %v974 = vld [vmem:[%s959 + $0x38] sm:$0xf]
    %v975 = vld [vmem:[%s959 + $0x3c] sm:$0xf]
    %s976 = scalar_lea.vmem %s2, 8
    %v977 = vld [vmem:[%s976] sm:$0x1]
    %v979 = vlaneseq
    %v980 = vshrl.u32 %v979, 7
    %v981 = vsub.s32 0, %v980
    %v982 = vrot.slane %v977, %v981
    %v1000 = vunpack.c.l.b16 %v960
    %v1001 = vunpack.c.l.b16 %v961
    %v1002 = vunpack.c.l.b16 %v962
    %v1003 = vunpack.c.l.b16 %v963
    %v1004 = vunpack.c.l.b16 %v964
    %v1005 = vunpack.c.l.b16 %v965
    %v1006 = vunpack.c.l.b16 %v966
    %v1007 = vunpack.c.l.b16 %v967
    %v1008 = vunpack.c.l.b16 %v968
    %v1009 = vunpack.c.l.b16 %v969
    %v1010 = vunpack.c.l.b16 %v970
    %v1011 = vunpack.c.l.b16 %v971
    %v1012 = vunpack.c.l.b16 %v972
    %v1013 = vunpack.c.l.b16 %v973
    %v1014 = vunpack.c.l.b16 %v974
    %v1015 = vunpack.c.l.b16 %v975
    %v1016 = vpack.c.b16 %v1001, %v1000
    %v1017 = vpack.c.b16 %v1003, %v1002
    %v1018 = vpack.c.b16 %v1005, %v1004
    %v1019 = vpack.c.b16 %v1007, %v1006
    %v1020 = vpack.c.b16 %v1009, %v1008
    %v1021 = vpack.c.b16 %v1011, %v1010
    %v1022 = vpack.c.b16 %v1013, %v1012
    %v1023 = vpack.c.b16 %v1015, %v1014
    %1032 = vmatprep.subr.bf16.mxu0 0
    %1033 = vmatpush1.bf16.msra.mxu0 %v1016
    %1034 = vmatprep.subr.bf16.mxu0 0
    %1035 = vmatpush1.bf16.msra.mxu0 %v1017
    %1036 = vmatprep.subr.bf16.mxu0 0
    %1037 = vmatpush1.bf16.msra.mxu0 %v1018
    %1038 = vmatprep.subr.bf16.mxu0 0
    %1039 = vmatpush1.bf16.msra.mxu0 %v1019
    %1040 = vmatprep.subr.bf16.mxu0 0
    %1041 = vmatpush1.bf16.msra.mxu0 %v1020
    %1042 = vmatprep.subr.bf16.mxu0 0
    %1043 = vmatpush1.bf16.msra.mxu0 %v1021
    %1044 = vmatprep.subr.bf16.mxu0 0
    %1045 = vmatpush1.bf16.msra.mxu0 %v1022
    %1046 = vmatprep.subr.bf16.mxu0 0
    %1047 = vmatpush1.bf16.msra.mxu0 %v1023
    %1048 = vmatprep.subr.bf16.mxu0 0
    %1049 = vmatpush1.bf16.msra.mxu0 0
    %1050 = vmatprep.subr.bf16.mxu0 0
    %1051 = vmatpush1.bf16.msra.mxu0 0
    %1052 = vmatprep.subr.bf16.mxu0 0
    %1053 = vmatpush1.bf16.msra.mxu0 0
    %1054 = vmatprep.subr.bf16.mxu0 0
    %1055 = vmatpush1.bf16.msra.mxu0 0
    %1056 = vmatprep.subr.bf16.mxu0 0
    %1057 = vmatpush1.bf16.msra.mxu0 0
    %1058 = vmatprep.subr.bf16.mxu0 0
    %1059 = vmatpush1.bf16.msra.mxu0 0
    %1060 = vmatprep.subr.bf16.mxu0 0
    %1061 = vmatpush1.bf16.msra.mxu0 0
    %1062 = vmatprep.subr.bf16.mxu0 0
    %1063 = vmatpush1.bf16.msra.mxu0 0
    %1064 = vmatprep.mubr.bf16.mxu0 0
    %1065 = vmatmul.mubr.bf16.gmra.mrb[0].mxu0 %v958
    %v1066 = vpop.f32.mrb[0].mxu0
    %v1067 = vadd.f32 %v982, %v1066
    %v1068 = vpop.f32.mrb[0].mxu0
    %v1069 = vpop.f32.mrb[0].mxu0
    %v1070 = vpop.f32.mrb[0].mxu0
    %1071 = vdwg.mxu0
    %v1072 = vxor.u32 %v1067, 2147483648
    %v1073 = vmul.f32 %v1072, 1.442695
    %v1074 = vpow.pop %v1073
    %v1075 = vadd.f32 %v1074, 1.0
    %v1076 = vrcp.pop %v1075
    %v1077 = vmul.f32 1.0, %v1076
    %v1078 = vpack.c.bf16 %v1077, %v1077
    %s1079 = scalar_lea.vmem [#allocation2], 576
    %v1080 = vld [vmem:[%s1079] sm:$0xf]
    %v1081 = vld [vmem:[%s1079 + $0x4] sm:$0xf]
    %v1082 = vld [vmem:[%s1079 + $0x8] sm:$0xf]
    %v1083 = vld [vmem:[%s1079 + $0xc] sm:$0xf]
    %v1084 = vld [vmem:[%s1079 + $0x10] sm:$0xf]
    %v1085 = vld [vmem:[%s1079 + $0x14] sm:$0xf]
    %v1086 = vld [vmem:[%s1079 + $0x18] sm:$0xf]
    %v1087 = vld [vmem:[%s1079 + $0x1c] sm:$0xf]
    %v1088 = vld [vmem:[%s1079 + $0x20] sm:$0xf]
    %v1089 = vld [vmem:[%s1079 + $0x24] sm:$0xf]
    %v1090 = vld [vmem:[%s1079 + $0x28] sm:$0xf]
    %v1091 = vld [vmem:[%s1079 + $0x2c] sm:$0xf]
    %v1092 = vld [vmem:[%s1079 + $0x30] sm:$0xf]
    %v1093 = vld [vmem:[%s1079 + $0x34] sm:$0xf]
    %v1094 = vld [vmem:[%s1079 + $0x38] sm:$0xf]
    %v1095 = vld [vmem:[%s1079 + $0x3c] sm:$0xf]
    %s1096 = scalar_lea.vmem %s2, 9
    %v1097 = vld [vmem:[%s1096] sm:$0x1]
    %v1099 = vlaneseq
    %v1100 = vshrl.u32 %v1099, 7
    %v1101 = vsub.s32 0, %v1100
    %v1102 = vrot.slane %v1097, %v1101
    %v1120 = vunpack.c.l.b16 %v1080
    %v1121 = vunpack.c.l.b16 %v1081
    %v1122 = vunpack.c.l.b16 %v1082
    %v1123 = vunpack.c.l.b16 %v1083
    %v1124 = vunpack.c.l.b16 %v1084
    %v1125 = vunpack.c.l.b16 %v1085
    %v1126 = vunpack.c.l.b16 %v1086
    %v1127 = vunpack.c.l.b16 %v1087
    %v1128 = vunpack.c.l.b16 %v1088
    %v1129 = vunpack.c.l.b16 %v1089
    %v1130 = vunpack.c.l.b16 %v1090
    %v1131 = vunpack.c.l.b16 %v1091
    %v1132 = vunpack.c.l.b16 %v1092
    %v1133 = vunpack.c.l.b16 %v1093
    %v1134 = vunpack.c.l.b16 %v1094
    %v1135 = vunpack.c.l.b16 %v1095
    %v1136 = vpack.c.b16 %v1121, %v1120
    %v1137 = vpack.c.b16 %v1123, %v1122
    %v1138 = vpack.c.b16 %v1125, %v1124
    %v1139 = vpack.c.b16 %v1127, %v1126
    %v1140 = vpack.c.b16 %v1129, %v1128
    %v1141 = vpack.c.b16 %v1131, %v1130
    %v1142 = vpack.c.b16 %v1133, %v1132
    %v1143 = vpack.c.b16 %v1135, %v1134
    %1152 = vmatprep.subr.bf16.mxu0 0
    %1153 = vmatpush1.bf16.msra.mxu0 %v1136
    %1154 = vmatprep.subr.bf16.mxu0 0
    %1155 = vmatpush1.bf16.msra.mxu0 %v1137
    %1156 = vmatprep.subr.bf16.mxu0 0
    %1157 = vmatpush1.bf16.msra.mxu0 %v1138
    %1158 = vmatprep.subr.bf16.mxu0 0
    %1159 = vmatpush1.bf16.msra.mxu0 %v1139
    %1160 = vmatprep.subr.bf16.mxu0 0
    %1161 = vmatpush1.bf16.msra.mxu0 %v1140
    %1162 = vmatprep.subr.bf16.mxu0 0
    %1163 = vmatpush1.bf16.msra.mxu0 %v1141
    %1164 = vmatprep.subr.bf16.mxu0 0
    %1165 = vmatpush1.bf16.msra.mxu0 %v1142
    %1166 = vmatprep.subr.bf16.mxu0 0
    %1167 = vmatpush1.bf16.msra.mxu0 %v1143
    %1168 = vmatprep.subr.bf16.mxu0 0
    %1169 = vmatpush1.bf16.msra.mxu0 0
    %1170 = vmatprep.subr.bf16.mxu0 0
    %1171 = vmatpush1.bf16.msra.mxu0 0
    %1172 = vmatprep.subr.bf16.mxu0 0
    %1173 = vmatpush1.bf16.msra.mxu0 0
    %1174 = vmatprep.subr.bf16.mxu0 0
    %1175 = vmatpush1.bf16.msra.mxu0 0
    %1176 = vmatprep.subr.bf16.mxu0 0
    %1177 = vmatpush1.bf16.msra.mxu0 0
    %1178 = vmatprep.subr.bf16.mxu0 0
    %1179 = vmatpush1.bf16.msra.mxu0 0
    %1180 = vmatprep.subr.bf16.mxu0 0
    %1181 = vmatpush1.bf16.msra.mxu0 0
    %1182 = vmatprep.subr.bf16.mxu0 0
    %1183 = vmatpush1.bf16.msra.mxu0 0
    %1184 = vmatprep.mubr.bf16.mxu0 0
    %1185 = vmatmul.mubr.bf16.gmra.mrb[0].mxu0 %v1078
    %v1186 = vpop.f32.mrb[0].mxu0
    %v1187 = vadd.f32 %v1102, %v1186
    %v1188 = vpop.f32.mrb[0].mxu0
    %v1189 = vpop.f32.mrb[0].mxu0
    %v1190 = vpop.f32.mrb[0].mxu0
    %1191 = vdwg.mxu0
    %v1192 = vtanh.pop %v1187
    %v1193 = vpack.c.bf16 %v1192, %v1192
    %s1194 = scalar_lea.vmem [#allocation2], 640
    %v1195 = vld [vmem:[%s1194] sm:$0xf]
    %v1196 = vld [vmem:[%s1194 + $0x4] sm:$0xf]
    %v1197 = vld [vmem:[%s1194 + $0x8] sm:$0xf]
    %v1198 = vld [vmem:[%s1194 + $0xc] sm:$0xf]
    %v1199 = vld [vmem:[%s1194 + $0x10] sm:$0xf]
    %v1200 = vld [vmem:[%s1194 + $0x14] sm:$0xf]
    %v1201 = vld [vmem:[%s1194 + $0x18] sm:$0xf]
    %v1202 = vld [vmem:[%s1194 + $0x1c] sm:$0xf]
    %v1203 = vld [vmem:[%s1194 + $0x20] sm:$0xf]
    %v1204 = vld [vmem:[%s1194 + $0x24] sm:$0xf]
    %v1205 = vld [vmem:[%s1194 + $0x28] sm:$0xf]
    %v1206 = vld [vmem:[%s1194 + $0x2c] sm:$0xf]
    %v1207 = vld [vmem:[%s1194 + $0x30] sm:$0xf]
    %v1208 = vld [vmem:[%s1194 + $0x34] sm:$0xf]
    %v1209 = vld [vmem:[%s1194 + $0x38] sm:$0xf]
    %v1210 = vld [vmem:[%s1194 + $0x3c] sm:$0xf]
    %v1227 = vunpack.c.l.b16 %v1195
    %v1228 = vunpack.c.l.b16 %v1196
    %v1229 = vunpack.c.l.b16 %v1197
    %v1230 = vunpack.c.l.b16 %v1198
    %v1231 = vunpack.c.l.b16 %v1199
    %v1232 = vunpack.c.l.b16 %v1200
    %v1233 = vunpack.c.l.b16 %v1201
    %v1234 = vunpack.c.l.b16 %v1202
    %v1235 = vunpack.c.l.b16 %v1203
    %v1236 = vunpack.c.l.b16 %v1204
    %v1237 = vunpack.c.l.b16 %v1205
    %v1238 = vunpack.c.l.b16 %v1206
    %v1239 = vunpack.c.l.b16 %v1207
    %v1240 = vunpack.c.l.b16 %v1208
    %v1241 = vunpack.c.l.b16 %v1209
    %v1242 = vunpack.c.l.b16 %v1210
    %v1243 = vpack.c.b16 %v1228, %v1227
    %v1244 = vpack.c.b16 %v1230, %v1229
    %v1245 = vpack.c.b16 %v1232, %v1231
    %v1246 = vpack.c.b16 %v1234, %v1233
    %v1247 = vpack.c.b16 %v1236, %v1235
    %v1248 = vpack.c.b16 %v1238, %v1237
    %v1249 = vpack.c.b16 %v1240, %v1239
    %v1250 = vpack.c.b16 %v1242, %v1241
    %1259 = vmatprep.subr.bf16.mxu0 0
    %1260 = vmatpush1.bf16.msra.mxu0 %v1243
    %1261 = vmatprep.subr.bf16.mxu0 0
    %1262 = vmatpush1.bf16.msra.mxu0 %v1244
    %1263 = vmatprep.subr.bf16.mxu0 0
    %1264 = vmatpush1.bf16.msra.mxu0 %v1245
    %1265 = vmatprep.subr.bf16.mxu0 0
    %1266 = vmatpush1.bf16.msra.mxu0 %v1246
    %1267 = vmatprep.subr.bf16.mxu0 0
    %1268 = vmatpush1.bf16.msra.mxu0 %v1247
    %1269 = vmatprep.subr.bf16.mxu0 0
    %1270 = vmatpush1.bf16.msra.mxu0 %v1248
    %1271 = vmatprep.subr.bf16.mxu0 0
    %1272 = vmatpush1.bf16.msra.mxu0 %v1249
    %1273 = vmatprep.subr.bf16.mxu0 0
    %1274 = vmatpush1.bf16.msra.mxu0 %v1250
    %1275 = vmatprep.subr.bf16.mxu0 0
    %1276 = vmatpush1.bf16.msra.mxu0 0
    %1277 = vmatprep.subr.bf16.mxu0 0
    %1278 = vmatpush1.bf16.msra.mxu0 0
    %1279 = vmatprep.subr.bf16.mxu0 0
    %1280 = vmatpush1.bf16.msra.mxu0 0
    %1281 = vmatprep.subr.bf16.mxu0 0
    %1282 = vmatpush1.bf16.msra.mxu0 0
    %1283 = vmatprep.subr.bf16.mxu0 0
    %1284 = vmatpush1.bf16.msra.mxu0 0
    %1285 = vmatprep.subr.bf16.mxu0 0
    %1286 = vmatpush1.bf16.msra.mxu0 0
    %1287 = vmatprep.subr.bf16.mxu0 0
    %1288 = vmatpush1.bf16.msra.mxu0 0
    %1289 = vmatprep.subr.bf16.mxu0 0
    %1290 = vmatpush1.bf16.msra.mxu0 0
    %1291 = vmatprep.mubr.bf16.mxu0 0
    %1292 = vmatmul.mubr.bf16.gmra.mrb[0].mxu0 %v1193
    %v1293 = vpop.f32.mrb[0].mxu0
    %v1294 = vadd.f32 0.0, %v1293
    %v1295 = vpop.f32.mrb[0].mxu0
    %v1296 = vpop.f32.mrb[0].mxu0
    %v1297 = vpop.f32.mrb[0].mxu0
    %1298 = vdwg.mxu0
    %1299 = vst [vmem:[%s3] sm:$0xff] %v1294
    // Predicated region
    $region18: #{mlp_forward.1} parent=1 // pred_check
      _
    $region19: #{mlp_forward.1} parent=1 // pred_check_branch
      %1301 = sbr.rel (0) target = $region21
    $region20: #{mlp_forward.1} parent=1 // pred_region
      _
    $region21: #{mlp_forward.1} parent=1 // pred_fallthru
      _
    // Predicated region
    $region22: #{mlp_forward.1} parent=1 // pred_check
      _
    $region23: #{mlp_forward.1} parent=1 // pred_check_branch
      %1303 = sbr.rel (0) target = $region25
    $region24: #{mlp_forward.1} parent=1 // pred_region
      _
    $region25: #{mlp_forward.1} parent=1 // pred_fallthru
      _
    %1304 = vsyncpa [#allocation3], 1

</llo_original>
